<compile_context>
chip_gen: v5e
topology: v5e:2x2
jax: 0.10.0
libtpu: 0.0.40
codegen_flags: <defaults>
</compile_context>

<pallas_src>
import numpy as np
import jax
import jax.numpy as jnp
from jax.experimental import pallas as pl
from jax.experimental.pallas import tpu as pltpu

EPS = 1e-5  # nn.BatchNorm2d default eps


# ---------------------------------------------------------------------------
# Pallas kernels
# ---------------------------------------------------------------------------
def _make_stage_a_kernel(width, cout):
    """Per-branch dilated-conv GEMMs (+ partial BN1 statistics)."""

    def kernel(*refs):
        p_refs = refs[:width]                    # each (9*cin, tm)   compute dtype
        w_refs = refs[width:2 * width]           # each (cout, 9*cin) compute dtype
        y_ref, stats_ref = refs[2 * width], refs[2 * width + 1]

        for i in range(width):
            # single MXU GEMM per branch, K = 9*cin, f32 accumulation
            acc = jnp.dot(w_refs[i][...], p_refs[i][...],
                          preferred_element_type=jnp.float32)        # (cout, tm)
            lo, hi = i * cout, (i + 1) * cout
            # write directly into this branch's channel slice (== torch.cat(dim=1))
            y_ref[lo:hi, :] = acc.astype(y_ref.dtype)
            # per-channel partial sums for BN1 (zero-padded tail cols contribute 0)
            stats_ref[0, lo:hi, 0:1] = jnp.sum(acc, axis=1, keepdims=True)
            stats_ref[0, lo:hi, 1:2] = jnp.sum(acc * acc, axis=1, keepdims=True)

    return kernel


def _make_stage_b_kernel(tm, m_true):
    """BN1 + PReLU fused on the im2col'd taps, branch1x1 GEMM, partial BN2 stats."""

    def kernel(p_ref, w_ref, scale_ref, shift_ref, alpha_ref, z_ref, stats_ref):
        # BN1 + PReLU applied per contraction row (tap-major, channel-minor), f32
        p = p_ref[...].astype(jnp.float32)                 # (9*cmid, tm)
        pn = p * scale_ref[...] + shift_ref[...]
        alpha = alpha_ref[0, 0]
        pn = jnp.where(pn > 0, pn, alpha * pn)

        z = jnp.dot(w_ref[...], pn.astype(w_ref.dtype),
                    preferred_element_type=jnp.float32)    # (cout, tm)
        z_ref[...] = z

        # partial BN2 statistics; mask zero-padded tail columns (their
        # post-affine value is non-zero, unlike stage A).
        col = jax.lax.broadcasted_iota(jnp.int32, z.shape, 1)
        valid = m_true - pl.program_id(0) * tm
        zm = jnp.where(col < valid, z, 0.0)
        stats_ref[0, :, 0:1] = jnp.sum(zm, axis=1, keepdims=True)
        stats_ref[0, :, 1:2] = jnp.sum(zm * zm, axis=1, keepdims=True)

    return kernel


def _stage_c_kernel(z_ref, x_ref, scale_ref, shift_ref, alpha_ref, out_ref):
    """BN2 + residual add + PReLU (drop_rate==0 -> dropout is the identity)."""
    r = z_ref[...] * scale_ref[...] + shift_ref[...] + x_ref[...]
    alpha = alpha_ref[0, 0]
    out_ref[...] = jnp.where(r > 0, r, alpha * r)


# ---------------------------------------------------------------------------
# JAX glue
# ---------------------------------------------------------------------------
def _im2col_cm(x_cm, pad, dil):
    """(C, N, H, W) -> (9*C, N*H*W): ReflectionPad2d(pad) + stack the nine
    dilated 3x3 taps along the contraction axis (tap-major, channel-minor)."""
    c, n, h, w = x_cm.shape
    xp = jnp.pad(x_cm, ((0, 0), (0, 0), (pad, pad), (pad, pad)), mode="reflect")
    taps = []
    for ky in range(3):
        for kx in range(3):
            sl = xp[:, :, ky * dil:ky * dil + h, kx * dil:kx * dil + w]
            taps.append(sl.reshape(c, n * h * w))
    return jnp.concatenate(taps, axis=0)


def _w_to_gemm(w_torch):
    """torch (Cout, Cin, 3, 3) -> (Cout, 9*Cin) with tap-major rows (matches _im2col_cm)."""
    co, ci = w_torch.shape[0], w_torch.shape[1]
    return jnp.transpose(w_torch, (0, 2, 3, 1)).reshape(co, 9 * ci)


def _pad_cols(a, m_pad):
    return jnp.pad(a, ((0, 0), (0, m_pad - a.shape[1])))


def _pick_row_tile(m):
    # largest multiple-of-128 tile (<=1024) that keeps at least 2 grid steps
    for t in (1024, 512, 256, 128):
        if m >= 2 * t:
            return t
    return 128


def _compiler_params():
    return pltpu.CompilerParams(dimension_semantics=("parallel",),
                                vmem_limit_bytes=32 * 1024 * 1024)


def _bn_affine(stats, m, gamma, beta):
    """Finish the two-pass BatchNorm: (num_tiles, C, 2) partial sums -> scale/shift."""
    s = jnp.sum(stats[:, :, 0], axis=0)
    q = jnp.sum(stats[:, :, 1], axis=0)
    mean = s / m
    var = jnp.maximum(q / m - mean * mean, 0.0)   # biased (training-mode) variance
    scale = gamma.astype(jnp.float32) * jax.lax.rsqrt(var + EPS)
    shift = beta.astype(jnp.float32) - mean * scale
    return scale, shift


def inception_block_forward(x_nchw, params, *, row_tile=None,
                            compute_dtype=jnp.bfloat16):
    n, cin, h, w = x_nchw.shape
    width = params["width"]
    cout = params["w_branch"][0].shape[0]         # torch layout (Cout, Cin, 3, 3)
    cmid = cout * width
    assert cin == cout, "residual add requires input_nc == output_nc"

    m = n * h * w
    tm = row_tile if row_tile is not None else _pick_row_tile(m)
    nt = pl.cdiv(m, tm)
    m_pad = nt * tm
    grid = (nt,)
    smem = pl.BlockSpec(memory_space=pltpu.MemorySpace.SMEM)

    x_cm = jnp.transpose(x_nchw.astype(jnp.float32), (1, 0, 2, 3))  # (C, N, H, W)

    # ---- stage A inputs: per-branch im2col patches + GEMM weights -----------
    patches, weights = [], []
    for i in range(width):
        d = 2 * i + 1          # ReflectionPad2d(d) + dilation d (requires d < H, W)
        p = _im2col_cm(x_cm, d, d).astype(compute_dtype)              # (9*cin, m)
        patches.append(_pad_cols(p, m_pad))
        weights.append(_w_to_gemm(params["w_branch"][i]).astype(compute_dtype))

    # ---- stage A: dilated-branch GEMMs + partial BN1 stats -------------------
    y_conv, stats1 = pl.pallas_call(
        _make_stage_a_kernel(width, cout),
        grid=grid,
        in_specs=(
            [pl.BlockSpec((9 * cin, tm), lambda j: (0, j)) for _ in range(width)]
            + [pl.BlockSpec((cout, 9 * cin), lambda j: (0, 0)) for _ in range(width)]),
        out_specs=[pl.BlockSpec((cmid, tm), lambda j: (0, j)),
                   pl.BlockSpec((1, cmid, 2), lambda j: (j, 0, 0))],
        out_shape=[jax.ShapeDtypeStruct((cmid, m_pad), compute_dtype),
                   jax.ShapeDtypeStruct((nt, cmid, 2), jnp.float32)],
        compiler_params=_compiler_params(),
    )(*patches, *weights)

    scale1, shift1 = _bn_affine(stats1, m, params["gamma1"], params["beta1"])

    # ---- stage B inputs: im2col of the (un-normalized) concat output ---------
    y_sp = y_conv[:, :m].reshape(cmid, n, h, w)
    p2 = _pad_cols(_im2col_cm(y_sp, 1, 1), m_pad)                     # (9*cmid, m_pad)
    w2 = _w_to_gemm(params["w_1x1"]).astype(compute_dtype)            # (cout, 9*cmid)
    scale1_rep = jnp.tile(scale1, 9).reshape(9 * cmid, 1)             # per-row BN1 affine
    shift1_rep = jnp.tile(shift1, 9).reshape(9 * cmid, 1)
    alpha = jnp.full((1, 1), params["prelu_a"], jnp.float32)

    # ---- stage B: fused BN1+PReLU -> branch1x1 GEMM + partial BN2 stats -------
    z_conv, stats2 = pl.pallas_call(
        _make_stage_b_kernel(tm, m),
        grid=grid,
        in_specs=[pl.BlockSpec((9 * cmid, tm), lambda j: (0, j)),
                  pl.BlockSpec((cout, 9 * cmid), lambda j: (0, 0)),
                  pl.BlockSpec((9 * cmid, 1), lambda j: (0, 0)),
                  pl.BlockSpec((9 * cmid, 1), lambda j: (0, 0)),
                  smem],
        out_specs=[pl.BlockSpec((cout, tm), lambda j: (0, j)),
                   pl.BlockSpec((1, cout, 2), lambda j: (j, 0, 0))],
        out_shape=[jax.ShapeDtypeStruct((cout, m_pad), jnp.float32),
                   jax.ShapeDtypeStruct((nt, cout, 2), jnp.float32)],
        compiler_params=_compiler_params(),
    )(p2, w2, scale1_rep, shift1_rep, alpha)

    scale2, shift2 = _bn_affine(stats2, m, params["gamma2"], params["beta2"])

    # ---- stage C: BN2 + residual + PReLU -------------------------------------
    x_res = _pad_cols(x_cm.reshape(cin, m), m_pad)
    out_t = pl.pallas_call(
        _stage_c_kernel,
        grid=grid,
        in_specs=[pl.BlockSpec((cout, tm), lambda j: (0, j)),
                  pl.BlockSpec((cin, tm), lambda j: (0, j)),
                  pl.BlockSpec((cout, 1), lambda j: (0, 0)),
                  pl.BlockSpec((cout, 1), lambda j: (0, 0)),
                  smem],
        out_specs=pl.BlockSpec((cout, tm), lambda j: (0, j)),
        out_shape=jax.ShapeDtypeStruct((cout, m_pad), jnp.float32),
        compiler_params=_compiler_params(),
    )(z_conv, x_res, scale2.reshape(cout, 1), shift2.reshape(cout, 1), alpha)

    out = out_t[:, :m].reshape(cout, n, h, w)
    return jnp.transpose(out, (1, 0, 2, 3))                            # NCHW


# ---------------------------------------------------------------------------
# Pure-JAX f32 reference (mirrors the PyTorch forward) for validation
# ---------------------------------------------------------------------------
def reference_forward(x_nchw, params):
    x = jnp.transpose(x_nchw, (0, 2, 3, 1)).astype(jnp.float32)        # NHWC
    width = params["width"]

    def conv(inp, wt_torch, dil):
        xp = jnp.pad(inp, ((0, 0), (dil, dil), (dil, dil), (0, 0)), mode="reflect")
        wk = jnp.transpose(wt_torch, (2, 3, 1, 0))                      # HWIO
        return jax.lax.conv_general_dilated(
            xp, wk, window_strides=(1, 1), padding="VALID",
            rhs_dilation=(dil, dil),
            dimension_numbers=("NHWC", "HWIO", "NHWC"))

    def bn(t, g, b):
        mean = jnp.mean(t, axis=(0, 1, 2), keepdims=True)
        var = jnp.mean(jnp.square(t - mean), axis=(0, 1, 2), keepdims=True)
        return (t - mean) * jax.lax.rsqrt(var + EPS) * g + b

    def prelu(t, a):
        return jnp.where(t > 0, t, a * t)

    outs = [conv(x, params["w_branch"][i], 2 * i + 1) for i in range(width)]
    y = jnp.concatenate(outs, axis=-1)
    y = prelu(bn(y, params["gamma1"], params["beta1"]), params["prelu_a"])
    yp = jnp.pad(y, ((0, 0), (1, 1), (1, 1), (0, 0)), mode="reflect")
    w1 = jnp.transpose(params["w_1x1"], (2, 3, 1, 0))
    z = jax.lax.conv_general_dilated(
        yp, w1, (1, 1), "VALID", dimension_numbers=("NHWC", "HWIO", "NHWC"))
    z = bn(z, params["gamma2"], params["beta2"])
    out = prelu(z + x, params["prelu_a"])
    return jnp.transpose(out, (0, 3, 1, 2))


# ---------------------------------------------------------------------------
if __name__ == "__main__":
    # Small shapes consistent with the module: residual requires input_nc == output_nc.
    N, C, H, W = 2, 4, 16, 16
    width = 2
    input_nc = output_nc = C
    cmid = output_nc * width

    key = jax.random.PRNGKey(0)
    keys = jax.random.split(key, 8)

    params = {
        "width": width,
        # Conv2d weights in torch layout (Cout, Cin, kH, kW), bias=False.
        "w_branch": [0.1 * jax.random.normal(keys[i], (output_nc, input_nc, 3, 3),
                                             jnp.float32) for i in range(width)],
        "w_1x1": 0.1 * jax.random.normal(keys[2], (output_nc, cmid, 3, 3), jnp.float32),
        # BatchNorm affine params (deterministic, non-trivial values).
        "gamma1": 1.0 + 0.1 * jax.random.normal(keys[3], (cmid,), jnp.float32),
        "beta1": 0.1 * jax.random.normal(keys[4], (cmid,), jnp.float32),
        "gamma2": 1.0 + 0.1 * jax.random.normal(keys[5], (output_nc,), jnp.float32),
        "beta2": 0.1 * jax.random.normal(keys[6], (output_nc,), jnp.float32),
        "prelu_a": 0.25,  # nn.PReLU() default init
    }

    x = jax.random.normal(keys[7], (N, C, H, W), jnp.float32)

    ref = jax.block_until_ready(reference_forward(x, params))

    # 1) exact-semantics check: f32 MXU operands, tight tolerance.
    out_f32 = jax.block_until_ready(
        inception_block_forward(x, params, compute_dtype=jnp.float32))
    np.testing.assert_allclose(np.asarray(out_f32), np.asarray(ref),
                               rtol=1e-4, atol=1e-4)

    # 2) default fast path: bf16 MXU operands (f32 accumulation + f32 epilogue);
    #    looser tolerance vs the f32 reference because of bf16 operand rounding.
    out_bf16 = jax.block_until_ready(inception_block_forward(x, params))
    np.testing.assert_allclose(np.asarray(out_bf16), np.asarray(ref),
                               rtol=6e-2, atol=6e-2)

    print("KERNEL_OK")
</pallas_src>

<mosaic_0001>
module attributes {stable_mosaic.version = 11 : i64} {
  func.func @kernel(%arg0: i32, %arg1: memref<36x256xf32, #tpu.memory_space<vmem>>, %arg2: memref<36x256xf32, #tpu.memory_space<vmem>>, %arg3: memref<4x36xf32, #tpu.memory_space<vmem>>, %arg4: memref<4x36xf32, #tpu.memory_space<vmem>>, %arg5: memref<8x256xf32, #tpu.memory_space<vmem>>, %arg6: memref<1x8x2xf32, #tpu.memory_space<vmem>>) attributes {dimension_semantics = [#tpu.dimension_semantics<parallel>], iteration_bounds = array<i64: 2>, scalar_prefetch = 0 : i64, scratch_operands = 0 : i64, tpu.core_type = #tpu.core_type<tc>, window_params = [{transform_indices = @transform_0, window_bounds = array<i64: 36, 256>}, {transform_indices = @transform_1, window_bounds = array<i64: 36, 256>}, {pipeline_mode = #tpu.pipeline_mode<synchronous>, transform_indices = @transform_2, window_bounds = array<i64: 4, 36>}, {pipeline_mode = #tpu.pipeline_mode<synchronous>, transform_indices = @transform_3, window_bounds = array<i64: 4, 36>}, {transform_indices = @transform_4, window_bounds = array<i64: 8, 256>}, {transform_indices = @transform_5, window_bounds = array<i64: 1, 8, 2>}]} {
    %c0 = arith.constant 0 : index
    %c0_0 = arith.constant 0 : index
    %0 = vector.load %arg3[%c0, %c0_0] : memref<4x36xf32, #tpu.memory_space<vmem>>, vector<4x36xf32>
    %c0_1 = arith.constant 0 : index
    %c0_2 = arith.constant 0 : index
    %1 = vector.load %arg1[%c0_1, %c0_2] : memref<36x256xf32, #tpu.memory_space<vmem>>, vector<36x256xf32>
    %cst = arith.constant dense<0.000000e+00> : vector<4x256xf32>
    %2 = tpu.matmul %0, %1, %cst {dimension_numbers = #tpu.dot_dimension_numbers<[1], [0], [0], [1], [0, 0, 1, 1], [], []>} : vector<4x36xf32>, vector<36x256xf32>, vector<4x256xf32> -> vector<4x256xf32>
    %c0_3 = arith.constant 0 : index
    %c0_4 = arith.constant 0 : index
    %3 = vector.load %arg5[%c0_3, %c0_4] : memref<8x256xf32, #tpu.memory_space<vmem>>, vector<4x256xf32>
    tpu.vector_store %arg5[%c0_3, %c0_4], %2 {strides = array<i32>} : memref<8x256xf32, #tpu.memory_space<vmem>>, vector<4x256xf32>,
    %cst_5 = arith.constant dense<0.000000e+00> : vector<4xf32>
    %4 = vector.multi_reduction <add>, %2, %cst_5 [1] : vector<4x256xf32> to vector<4xf32>
    %5 = vector.shape_cast %4 : vector<4xf32> to vector<4x1xf32>
    %c0_6 = arith.constant 0 : index
    %c0_7 = arith.constant 0 : index
    %c0_8 = arith.constant 0 : index
    %6 = vector.load %arg6[%c0_6, %c0_7, %c0_8] : memref<1x8x2xf32, #tpu.memory_space<vmem>>, vector<1x4x1xf32>
    %7 = vector.shape_cast %6 : vector<1x4x1xf32> to vector<4x1xf32>
    %8 = vector.shape_cast %5 : vector<4x1xf32> to vector<1x4x1xf32>
    tpu.vector_store %arg6[%c0_6, %c0_7, %c0_8], %8 {strides = array<i32>} : memref<1x8x2xf32, #tpu.memory_space<vmem>>, vector<1x4x1xf32>,
    %9 = arith.mulf %2, %2 : vector<4x256xf32>
    %cst_9 = arith.constant dense<0.000000e+00> : vector<4xf32>
    %10 = vector.multi_reduction <add>, %9, %cst_9 [1] : vector<4x256xf32> to vector<4xf32>
    %11 = vector.shape_cast %10 : vector<4xf32> to vector<4x1xf32>
    %c0_10 = arith.constant 0 : index
    %c0_11 = arith.constant 0 : index
    %c1 = arith.constant 1 : index
    %12 = vector.load %arg6[%c0_10, %c0_11, %c1] : memref<1x8x2xf32, #tpu.memory_space<vmem>>, vector<1x4x1xf32>
    %13 = vector.shape_cast %12 : vector<1x4x1xf32> to vector<4x1xf32>
    %14 = vector.shape_cast %11 : vector<4x1xf32> to vector<1x4x1xf32>
    tpu.vector_store %arg6[%c0_10, %c0_11, %c1], %14 {strides = array<i32>} : memref<1x8x2xf32, #tpu.memory_space<vmem>>, vector<1x4x1xf32>,
    %c0_12 = arith.constant 0 : index
    %c0_13 = arith.constant 0 : index
    %15 = vector.load %arg4[%c0_12, %c0_13] : memref<4x36xf32, #tpu.memory_space<vmem>>, vector<4x36xf32>
    %c0_14 = arith.constant 0 : index
    %c0_15 = arith.constant 0 : index
    %16 = vector.load %arg2[%c0_14, %c0_15] : memref<36x256xf32, #tpu.memory_space<vmem>>, vector<36x256xf32>
    %cst_16 = arith.constant dense<0.000000e+00> : vector<4x256xf32>
    %17 = tpu.matmul %15, %16, %cst_16 {dimension_numbers = #tpu.dot_dimension_numbers<[1], [0], [0], [1], [0, 0, 1, 1], [], []>} : vector<4x36xf32>, vector<36x256xf32>, vector<4x256xf32> -> vector<4x256xf32>
    %c4 = arith.constant 4 : index
    %c0_17 = arith.constant 0 : index
    %18 = vector.load %arg5[%c4, %c0_17] : memref<8x256xf32, #tpu.memory_space<vmem>>, vector<4x256xf32>
    tpu.vector_store %arg5[%c4, %c0_17], %17 {strides = array<i32>} : memref<8x256xf32, #tpu.memory_space<vmem>>, vector<4x256xf32>,
    %cst_18 = arith.constant dense<0.000000e+00> : vector<4xf32>
    %19 = vector.multi_reduction <add>, %17, %cst_18 [1] : vector<4x256xf32> to vector<4xf32>
    %20 = vector.shape_cast %19 : vector<4xf32> to vector<4x1xf32>
    %c0_19 = arith.constant 0 : index
    %c4_20 = arith.constant 4 : index
    %c0_21 = arith.constant 0 : index
    %21 = vector.load %arg6[%c0_19, %c4_20, %c0_21] : memref<1x8x2xf32, #tpu.memory_space<vmem>>, vector<1x4x1xf32>
    %22 = vector.shape_cast %21 : vector<1x4x1xf32> to vector<4x1xf32>
    %23 = vector.shape_cast %20 : vector<4x1xf32> to vector<1x4x1xf32>
    tpu.vector_store %arg6[%c0_19, %c4_20, %c0_21], %23 {strides = array<i32>} : memref<1x8x2xf32, #tpu.memory_space<vmem>>, vector<1x4x1xf32>,
    %24 = arith.mulf %17, %17 : vector<4x256xf32>
    %cst_22 = arith.constant dense<0.000000e+00> : vector<4xf32>
    %25 = vector.multi_reduction <add>, %24, %cst_22 [1] : vector<4x256xf32> to vector<4xf32>
    %26 = vector.shape_cast %25 : vector<4xf32> to vector<4x1xf32>
    %c0_23 = arith.constant 0 : index
    %c4_24 = arith.constant 4 : index
    %c1_25 = arith.constant 1 : index
    %27 = vector.load %arg6[%c0_23, %c4_24, %c1_25] : memref<1x8x2xf32, #tpu.memory_space<vmem>>, vector<1x4x1xf32>
    %28 = vector.shape_cast %27 : vector<1x4x1xf32> to vector<4x1xf32>
    %29 = vector.shape_cast %26 : vector<4x1xf32> to vector<1x4x1xf32>
    tpu.vector_store %arg6[%c0_23, %c4_24, %c1_25], %29 {strides = array<i32>} : memref<1x8x2xf32, #tpu.memory_space<vmem>>, vector<1x4x1xf32>,
    return
  }
  func.func @transform_0(%arg0: i32) -> (i32, i32) {
    %c0_i32 = arith.constant 0 : i32
    %c0_i32_0 = arith.constant 0 : i32
    return %c0_i32, %arg0 : i32, i32
  }
  func.func @transform_1(%arg0: i32) -> (i32, i32) {
    %c0_i32 = arith.constant 0 : i32
    %c0_i32_0 = arith.constant 0 : i32
    return %c0_i32, %arg0 : i32, i32
  }
  func.func @transform_2(%arg0: i32) -> (i32, i32) {
    %c0_i32 = arith.constant 0 : i32
    %c0_i32_0 = arith.constant 0 : i32
    %c0_i32_1 = arith.constant 0 : i32
    return %c0_i32, %c0_i32_0 : i32, i32
  }
  func.func @transform_3(%arg0: i32) -> (i32, i32) {
    %c0_i32 = arith.constant 0 : i32
    %c0_i32_0 = arith.constant 0 : i32
    %c0_i32_1 = arith.constant 0 : i32
    return %c0_i32, %c0_i32_0 : i32, i32
  }
  func.func @transform_4(%arg0: i32) -> (i32, i32) {
    %c0_i32 = arith.constant 0 : i32
    %c0_i32_0 = arith.constant 0 : i32
    return %c0_i32, %arg0 : i32, i32
  }
  func.func @transform_5(%arg0: i32) -> (i32, i32, i32) {
    %c0_i32 = arith.constant 0 : i32
    %c0_i32_0 = arith.constant 0 : i32
    %c0_i32_1 = arith.constant 0 : i32
    return %arg0, %c0_i32, %c0_i32_0 : i32, i32, i32
  }
}

</mosaic_0001>

<llo_original>
// kernel: tpu_custom_call.1
$region0: #{tpu_custom_call.1}
  #allocation0 [shape = 'u32[]', space=smem, size = 0x4, offset = 0x4, fixed_abs, tag = 'smem constant byte address 0x4 - core index']
  #allocation1 [shape = 'u32[72,128]{1,0:T(1,128)}', space=vmem, size = 0x9000, scoped, tag = 'internal scratch']
  %s0 = inlined_call_operand.hbm [shape: f32[36,512], index: 0, kind: input, shape index: {}]
  %s1 = inlined_call_operand.hbm [shape: f32[36,512], index: 1, kind: input, shape index: {}]
  %s2 = inlined_call_operand.hbm [shape: f32[4,36], index: 2, kind: input, shape index: {}]
  %s3 = inlined_call_operand.hbm [shape: f32[4,36], index: 3, kind: input, shape index: {}]
  %s4 = inlined_call_operand.hbm [shape: f32[8,512], index: 4, kind: output, shape index: {0}]
  %s5 = inlined_call_operand.vmem [shape: f32[2,8,2], index: 5, kind: output, shape index: {1}]
  %6 = xla_tuple %s4, %s5
  %s7 = sld [smem:[#allocation0]]
  $region73: #{tpu_custom_call.1} parent=0
    _
  %s9 = ssub.s32 1, %s7
  %s10 = scalar_select 0, %s9, %s7
  $region1: #{tpu_custom_call.1} parent=0
    #allocation2 [shape = 'u8[81920]{0}', space=vmem, size = 0x14000, scoped, tag = 'input window, operand 0']
    #allocation3 [shape = 's32[2]{0}', space=sflag, size = 0x8, scoped, tag = 'scoped memory for tpu_custom_call.1']
    #allocation4 [shape = 's32[2]{0}', space=sflag, size = 0x8, scoped, tag = 'scoped memory for tpu_custom_call.1']
    #allocation5 [shape = 'u8[81920]{0}', space=vmem, size = 0x14000, scoped, tag = 'input window, operand 1']
    #allocation6 [shape = 's32[2]{0}', space=sflag, size = 0x8, scoped, tag = 'scoped memory for tpu_custom_call.1']
    #allocation7 [shape = 'u8[2048]{0}', space=vmem, size = 0x800, scoped, tag = 'input window, operand 2, single buffered']
    #allocation8 [shape = 'u8[2048]{0}', space=vmem, size = 0x800, scoped, tag = 'input window, operand 3, single buffered']
    #allocation9 [shape = 's32[1]{0}', space=sflag, size = 0x4, scoped, tag = 'scoped memory for tpu_custom_call.1']
    #allocation10 [shape = 'u8[16384]{0}', space=vmem, size = 0x4000, scoped, tag = 'output window, operand 0']
    %11 = vsyncpa [#allocation3], 0
    %s12 = scalar_lea.sflag [#allocation3], 1
    %13 = vsyncpa %s12, 0
    %14 = vsyncpa [#allocation6], 0
    %s15 = scalar_lea.sflag [#allocation6], 1
    %16 = vsyncpa %s15, 0
    %17 = vsyncpa [#allocation9], 0
    %18 = vsyncpa [#allocation4], 0
    %s19 = scalar_lea.sflag [#allocation4], 1
    %20 = vsyncpa %s19, 0
    loop: start=0, step=1, limit=4
    $region2: #{tpu_custom_call.1} parent=1 // loop_pre_header
      _
    $region3: #{tpu_custom_call.1} parent=1 // loop_header
      %s22 = sphi 0, %s26
      %p23 = scmp.ge.s32.totalorder %s22, 4
      %s32 = sphi 0, %s34
      %s35 = sphi 0, %s32
      %s36 = sphi 0, %s35
      %s52 = sphi 0, %s36
      %s58 = sphi 0, %s60
      %s61 = sphi 0, %s58
      %s62 = sphi 0, %s61
      %s78 = sphi 0, %s62
      %s82 = sphi 0, %s82
      %s84 = sphi 0, %s82
      %s85 = sphi 0, %s84
      %s99 = sphi 0, %s85
      %s103 = sphi 0, %s103
      %s105 = sphi 0, %s103
      %s106 = sphi 0, %s105
      %s120 = sphi 0, %s106
      %s126 = sphi 0, %s128
      %s129 = sphi 0, %s126
      %s130 = sphi 0, %s129
      %s146 = sphi 0, %s130
      %s152 = sphi 0, %s154
      %s155 = sphi 0, %s152
      %s156 = sphi 0, %s155
      %s172 = sphi 0, %s156
    $region4: #{tpu_custom_call.1} parent=1 // loop_header_branch
      %25 = sbr.rel (%p23) target = $region8
    $region5: #{tpu_custom_call.1} parent=1 // loop_body
      %s27 = ssub.s32 %s22, 1
      %s28 = ssub.s32 %s22, 2
      %s29 = sadd.s32 %s22, 1
      %s30 = ssub.s32 %s22, %s29
      %p31 = scmp.eq.s32.totalorder %s30, 0
      %s33 = sadd.s32 %s32, 1
      %s34 = scalar_select %p31, %s32, %s33
      %p37 = pneg %p31
      %p38 = scmp.eq.s32.totalorder %s22, 1
      %p39 = por %p37, %p38
      %p40 = scmp.ne.s32.totalorder %s32, %s35
      %p41 = scmp.eq.s32.totalorder %s22, 0
      %p42 = por %p40, %p41
      %p43 = scmp.ne.s32.totalorder %s32, %s35
      %p44 = scmp.eq.s32.totalorder %s27, 1
      %p45 = por %p43, %p44
      %p46 = scmp.ne.s32.totalorder %s35, %s36
      %p47 = scmp.eq.s32.totalorder %s27, 0
      %p48 = por %p46, %p47
      %p49 = scmp.ne.s32.totalorder %s35, %s36
      %p50 = scmp.eq.s32.totalorder %s28, 1
      %p51 = por %p49, %p50
      %p53 = scmp.ne.s32.totalorder %s36, %s52
      %p54 = scmp.eq.s32.totalorder %s28, 0
      %p55 = por %p53, %p54
      %s56 = ssub.s32 %s22, %s29
      %p57 = scmp.eq.s32.totalorder %s56, 0
      %s59 = sadd.s32 %s58, 1
      %s60 = scalar_select %p57, %s58, %s59
      %p63 = pneg %p57
      %p64 = scmp.eq.s32.totalorder %s22, 1
      %p65 = por %p63, %p64
      %p66 = scmp.ne.s32.totalorder %s58, %s61
      %p67 = scmp.eq.s32.totalorder %s22, 0
      %p68 = por %p66, %p67
      %p69 = scmp.ne.s32.totalorder %s58, %s61
      %p70 = scmp.eq.s32.totalorder %s27, 1
      %p71 = por %p69, %p70
      %p72 = scmp.ne.s32.totalorder %s61, %s62
      %p73 = scmp.eq.s32.totalorder %s27, 0
      %p74 = por %p72, %p73
      %p75 = scmp.ne.s32.totalorder %s61, %s62
      %p76 = scmp.eq.s32.totalorder %s28, 1
      %p77 = por %p75, %p76
      %p79 = scmp.ne.s32.totalorder %s62, %s78
      %p80 = scmp.eq.s32.totalorder %s28, 0
      %p81 = por %p79, %p80
      %s83 = sadd.s32 %s82, 1
      %p86 = scmp.eq.s32.totalorder %s22, 1
      %p87 = scmp.ne.s32.totalorder %s82, %s84
      %p88 = scmp.eq.s32.totalorder %s22, 0
      %p89 = por %p87, %p88
      %p90 = scmp.ne.s32.totalorder %s82, %s84
      %p91 = scmp.eq.s32.totalorder %s27, 1
      %p92 = por %p90, %p91
      %p93 = scmp.ne.s32.totalorder %s84, %s85
      %p94 = scmp.eq.s32.totalorder %s27, 0
      %p95 = por %p93, %p94
      %p96 = scmp.ne.s32.totalorder %s84, %s85
      %p97 = scmp.eq.s32.totalorder %s28, 1
      %p98 = por %p96, %p97
      %p100 = scmp.ne.s32.totalorder %s85, %s99
      %p101 = scmp.eq.s32.totalorder %s28, 0
      %p102 = por %p100, %p101
      %s104 = sadd.s32 %s103, 1
      %p107 = scmp.eq.s32.totalorder %s22, 1
      %p108 = scmp.ne.s32.totalorder %s103, %s105
      %p109 = scmp.eq.s32.totalorder %s22, 0
      %p110 = por %p108, %p109
      %p111 = scmp.ne.s32.totalorder %s103, %s105
      %p112 = scmp.eq.s32.totalorder %s27, 1
      %p113 = por %p111, %p112
      %p114 = scmp.ne.s32.totalorder %s105, %s106
      %p115 = scmp.eq.s32.totalorder %s27, 0
      %p116 = por %p114, %p115
      %p117 = scmp.ne.s32.totalorder %s105, %s106
      %p118 = scmp.eq.s32.totalorder %s28, 1
      %p119 = por %p117, %p118
      %p121 = scmp.ne.s32.totalorder %s106, %s120
      %p122 = scmp.eq.s32.totalorder %s28, 0
      %p123 = por %p121, %p122
      %s124 = ssub.s32 %s22, %s29
      %p125 = scmp.eq.s32.totalorder %s124, 0
      %s127 = sadd.s32 %s126, 1
      %s128 = scalar_select %p125, %s126, %s127
      %p131 = pneg %p125
      %p132 = scmp.eq.s32.totalorder %s22, 1
      %p133 = por %p131, %p132
      %p134 = scmp.ne.s32.totalorder %s126, %s129
      %p135 = scmp.eq.s32.totalorder %s22, 0
      %p136 = por %p134, %p135
      %p137 = scmp.ne.s32.totalorder %s126, %s129
      %p138 = scmp.eq.s32.totalorder %s27, 1
      %p139 = por %p137, %p138
      %p140 = scmp.ne.s32.totalorder %s129, %s130
      %p141 = scmp.eq.s32.totalorder %s27, 0
      %p142 = por %p140, %p141
      %p143 = scmp.ne.s32.totalorder %s129, %s130
      %p144 = scmp.eq.s32.totalorder %s28, 1
      %p145 = por %p143, %p144
      %p147 = scmp.ne.s32.totalorder %s130, %s146
      %p148 = scmp.eq.s32.totalorder %s28, 0
      %p149 = por %p147, %p148
      %s150 = ssub.s32 %s22, %s29
      %p151 = scmp.eq.s32.totalorder %s150, 0
      %s153 = sadd.s32 %s152, 1
      %s154 = scalar_select %p151, %s152, %s153
      %p157 = pneg %p151
      %p158 = scmp.eq.s32.totalorder %s22, 1
      %p159 = por %p157, %p158
      %p160 = scmp.ne.s32.totalorder %s152, %s155
      %p161 = scmp.eq.s32.totalorder %s22, 0
      %p162 = por %p160, %p161
      %p163 = scmp.ne.s32.totalorder %s152, %s155
      %p164 = scmp.eq.s32.totalorder %s27, 1
      %p165 = por %p163, %p164
      %p166 = scmp.ne.s32.totalorder %s155, %s156
      %p167 = scmp.eq.s32.totalorder %s27, 0
      %p168 = por %p166, %p167
      %p169 = scmp.ne.s32.totalorder %s155, %s156
      %p170 = scmp.eq.s32.totalorder %s28, 1
      %p171 = por %p169, %p170
      %p173 = scmp.ne.s32.totalorder %s156, %s172
      %p174 = scmp.eq.s32.totalorder %s28, 0
      %p175 = por %p173, %p174
      %p176 = scmp.le.s32.totalorder 1, %s22
      %p177 = scmp.lt.s32.totalorder %s22, 3
      %p178 = pnand %p176, %p177
      %p179 = pneg %p178
      // Predicated region
      $region9: #{tpu_custom_call.1} parent=5 // pred_check
        _
      $region10: #{tpu_custom_call.1} parent=5 // pred_check_branch
        %181 = sbr.rel (%p178) target = $region12
      $region11: #{tpu_custom_call.1} parent=5 // pred_region
        %s182 = ssub.s32 %s22, 1
        // Predicated region
        $region13: #{tpu_custom_call.1} parent=11 // pred_check
          %p183 = pneg %p95
        $region14: #{tpu_custom_call.1} parent=11 // pred_check_branch
          %185 = sbr.rel (%p183) target = $region16
        $region15: #{tpu_custom_call.1} parent=11 // pred_region
          %187 = vsyncadd [#allocation6], 0
          %s189 = sshll.u32 %s2, 4
          %s190 = int_to_ptr.hbm [resolvable:$true] %s189
          %s191 = sshll.u32 [#allocation7], 4
          %s192 = int_to_ptr.vmem [resolvable:$true] %s191
          %194 = dma.hbm_to_vmem [thread:$0]  %s190, 64, %s192, [#allocation6]
        $region16: #{tpu_custom_call.1} parent=11 // pred_fallthru
          _
        // Predicated region
        $region17: #{tpu_custom_call.1} parent=11 // pred_check
          %p195 = pneg %p116
        $region18: #{tpu_custom_call.1} parent=11 // pred_check_branch
          %197 = sbr.rel (%p195) target = $region20
        $region19: #{tpu_custom_call.1} parent=11 // pred_region
          %199 = vsyncadd [#allocation9], 0
          %s201 = sshll.u32 %s3, 4
          %s202 = int_to_ptr.hbm [resolvable:$true] %s201
          %s203 = sshll.u32 [#allocation8], 4
          %s204 = int_to_ptr.vmem [resolvable:$true] %s203
          %206 = dma.hbm_to_vmem [thread:$0]  %s202, 64, %s204, [#allocation9]
        $region20: #{tpu_custom_call.1} parent=11 // pred_fallthru
          _
      $region12: #{tpu_custom_call.1} parent=5 // pred_fallthru
        _
      %p207 = scmp.lt.s32.totalorder %s22, 2
      // Predicated region
      $region21: #{tpu_custom_call.1} parent=5 // pred_check
        %p208 = pneg %p207
      $region22: #{tpu_custom_call.1} parent=5 // pred_check_branch
        %210 = sbr.rel (%p208) target = $region24
      $region23: #{tpu_custom_call.1} parent=5 // pred_region
        // Predicated region
        $region25: #{tpu_custom_call.1} parent=23 // pred_check
          %p211 = pneg %p42
        $region26: #{tpu_custom_call.1} parent=23 // pred_check_branch
          %213 = sbr.rel (%p211) target = $region28
        $region27: #{tpu_custom_call.1} parent=23 // pred_region
          %s214 = sand.u32 %s32, 1
          %s215 = scalar_lea.sflag [#allocation3], %s214
          %s216 = sand.u32 %s32, 1
          %s217 = smul.addr %s216, 80
          %s218 = scalar_lea.vmem [#allocation2], %s217
          %s219 = smul.u32 2, %s22
          %221 = vsyncadd %s215, 0
          %s222 = smul.addr %s219, 8
          %s223 = scalar_lea.hbm %s0, %s222
          %s224 = sshll.u32 %s223, 4
          %s225 = int_to_ptr.hbm [resolvable:$true] %s224
          %s226 = sshll.u32 %s218, 4
          %s227 = int_to_ptr.vmem [resolvable:$true] %s226
          %232 = dma.hbm_to_vmem [thread:$0]  %s225, 1280, %s227, %s215, 512, 256, 16
        $region28: #{tpu_custom_call.1} parent=23 // pred_fallthru
          _
        // Predicated region
        $region29: #{tpu_custom_call.1} parent=23 // pred_check
          %p233 = pneg %p68
        $region30: #{tpu_custom_call.1} parent=23 // pred_check_branch
          %235 = sbr.rel (%p233) target = $region32
        $region31: #{tpu_custom_call.1} parent=23 // pred_region
          %s236 = sand.u32 %s22, 1
          %s237 = scalar_lea.sflag [#allocation6], %s236
          %s238 = sand.u32 %s58, 1
          %s239 = smul.addr %s238, 80
          %s240 = scalar_lea.vmem [#allocation5], %s239
          %s241 = smul.u32 2, %s22
          %243 = vsyncadd %s237, 0
          %s244 = smul.addr %s241, 8
          %s245 = scalar_lea.hbm %s1, %s244
          %s246 = sshll.u32 %s245, 4
          %s247 = int_to_ptr.hbm [resolvable:$true] %s246
          %s248 = sshll.u32 %s240, 4
          %s249 = int_to_ptr.vmem [resolvable:$true] %s248
          %254 = dma.hbm_to_vmem [thread:$0]  %s247, 1280, %s249, %s237, 512, 256, 16
        $region32: #{tpu_custom_call.1} parent=23 // pred_fallthru
          _
      $region24: #{tpu_custom_call.1} parent=5 // pred_fallthru
        _
      %p255 = scmp.le.s32.totalorder 1, %s22
      %p256 = scmp.lt.s32.totalorder %s22, 3
      %p257 = pnand %p255, %p256
      %p258 = pneg %p257
      // Predicated region
      $region33: #{tpu_custom_call.1} parent=5 // pred_check
        _
      $region34: #{tpu_custom_call.1} parent=5 // pred_check_branch
        %260 = sbr.rel (%p257) target = $region36
      $region35: #{tpu_custom_call.1} parent=5 // pred_region
        %s261 = ssub.s32 %s22, 1
        %s262 = sand.u32 %s35, 1
        %s263 = scalar_lea.sflag [#allocation3], %s262
        %s264 = sand.u32 %s35, 1
        %s265 = smul.addr %s264, 80
        %s266 = scalar_lea.vmem [#allocation2], %s265
        // Predicated region
        $region37: #{tpu_custom_call.1} parent=35 // pred_check
          %p267 = pneg %p48
        $region38: #{tpu_custom_call.1} parent=35 // pred_check_branch
          %269 = sbr.rel (%p267) target = $region40
        $region39: #{tpu_custom_call.1} parent=35 // pred_region
          %271 = dma.done %s263, 1280
        $region40: #{tpu_custom_call.1} parent=35 // pred_fallthru
          _
        %s272 = sand.u32 %s27, 1
        %s273 = scalar_lea.sflag [#allocation6], %s272
        %s274 = sand.u32 %s61, 1
        %s275 = smul.addr %s274, 80
        %s276 = scalar_lea.vmem [#allocation5], %s275
        // Predicated region
        $region41: #{tpu_custom_call.1} parent=35 // pred_check
          %p277 = pneg %p74
        $region42: #{tpu_custom_call.1} parent=35 // pred_check_branch
          %279 = sbr.rel (%p277) target = $region44
        $region43: #{tpu_custom_call.1} parent=35 // pred_region
          %281 = dma.done %s273, 1280
        $region44: #{tpu_custom_call.1} parent=35 // pred_fallthru
          _
        // Predicated region
        $region45: #{tpu_custom_call.1} parent=35 // pred_check
          %p282 = pneg %p95
        $region46: #{tpu_custom_call.1} parent=35 // pred_check_branch
          %284 = sbr.rel (%p282) target = $region48
        $region47: #{tpu_custom_call.1} parent=35 // pred_region
          %286 = dma.done [#allocation6], 64
        $region48: #{tpu_custom_call.1} parent=35 // pred_fallthru
          _
        // Predicated region
        $region49: #{tpu_custom_call.1} parent=35 // pred_check
          %p287 = pneg %p116
        $region50: #{tpu_custom_call.1} parent=35 // pred_check_branch
          %289 = sbr.rel (%p287) target = $region52
        $region51: #{tpu_custom_call.1} parent=35 // pred_region
          %291 = dma.done [#allocation9], 64
        $region52: #{tpu_custom_call.1} parent=35 // pred_fallthru
          _
        %s292 = sand.u32 %s35, 1
        %s293 = scalar_lea.sflag [#allocation3], %s292
        %s294 = sand.u32 %s35, 1
        %s295 = smul.addr %s294, 80
        %s296 = scalar_lea.vmem [#allocation2], %s295
        %p297 = pneg %p48
        %p298 = pneg %p45
        %s299 = sand.u32 %s27, 1
        %s300 = scalar_lea.sflag [#allocation6], %s299
        %s301 = sand.u32 %s61, 1
        %s302 = smul.addr %s301, 80
        %s303 = scalar_lea.vmem [#allocation5], %s302
        %p304 = pneg %p74
        %p305 = pneg %p71
        %p306 = pneg %p95
        %p307 = pneg %p92
        %p308 = pneg %p116
        %p309 = pneg %p113
        %p310 = pneg %p142
        %p311 = pneg %p139
        %s312 = sand.u32 %s129, 1
        %s313 = scalar_lea.sflag [#allocation4], %s312
        %s314 = sand.u32 %s129, 1
        %s315 = smul.addr %s314, 16
        %s316 = scalar_lea.vmem [#allocation10], %s315
        %p317 = pneg %p168
        %p318 = pneg %p165
        %p319 = scmp.lt.s32.totalorder %s27, 1
        %s320 = scalar_select %p319, %s27, 1
        %s321 = smul.addr %s320, 8
        %s322 = scalar_lea.vmem %s5, %s321
        %s323 = smul.u32 2, %s27
        %s324 = smul.u32 2, %s27
        %s325 = smul.u32 2, %s27
        %p326 = scmp.lt.s32.totalorder %s27, 1
        %s327 = scalar_select %p326, %s27, 1
        %s328 = smul.addr %s327, 8
        %s329 = scalar_lea.vmem %s5, %s328
        %v330 = vld [vmem:[#allocation7] sm:$0xf]
        %v331 = vld [vmem:[%s266] sm:$0xff]
        %v332 = vld [vmem:[%s266 + $0x8] sm:$0xff]
        %v333 = vld [vmem:[%s266 + $0x10] sm:$0xff]
        %v334 = vld [vmem:[%s266 + $0x18] sm:$0xff]
        %v335 = vld [vmem:[%s266 + $0x20] sm:$0xff]
        %v336 = vld [vmem:[%s266 + $0x28] sm:$0xff]
        %v337 = vld [vmem:[%s266 + $0x30] sm:$0xff]
        %v338 = vld [vmem:[%s266 + $0x38] sm:$0xff]
        %v339 = vld [vmem:[%s266 + $0x40] sm:$0xf]
        %v340 = vld [vmem:[%s266 + $0x48] sm:$0xf]
        %vm341 = vcmask 293888
        %v343 = vsel %vm341, %v330, 0
        %vm345 = vcmask 1043456
        %v347 = vsel %vm345, %v339, 0
        %v350 = vsel %vm345, %v340, 0
        %352 = vmatpush.msra.mxu0 0.0
        %353 = vmatpush.msra.mxu0 0.0
        %354 = vmatpush.msra.mxu0 0.0
        %355 = vmatpush.msra.mxu0 0.0
        %356 = vmatpush.msra.mxu0 0.0
        %357 = vmatpush.msra.mxu0 0.0
        %358 = vmatpush.msra.mxu0 0.0
        %359 = vmatpush.msra.mxu0 0.0
        %360 = vmatpush.msra.mxu0 0.0
        %361 = vmatpush.msra.mxu0 0.0
        %362 = vmatpush.msra.mxu0 0.0
        %363 = vmatpush.msra.mxu0 %v347
        %364 = vmatpush.msra.mxu0 %v337
        %365 = vmatpush.msra.mxu0 %v335
        %366 = vmatpush.msra.mxu0 %v333
        %367 = vmatpush.msra.mxu0 %v331
        %368 = vmatmul.f32.gmra.mxu0 %v343
        %v369 = vpop.f32.mrf.mxu0
        %v370 = vadd.f32 0.0, %v369
        %371 = vdwg.mxu0
        %372 = vmatpush.msra.mxu0 0.0
        %373 = vmatpush.msra.mxu0 0.0
        %374 = vmatpush.msra.mxu0 0.0
        %375 = vmatpush.msra.mxu0 0.0
        %376 = vmatpush.msra.mxu0 0.0
        %377 = vmatpush.msra.mxu0 0.0
        %378 = vmatpush.msra.mxu0 0.0
        %379 = vmatpush.msra.mxu0 0.0
        %380 = vmatpush.msra.mxu0 0.0
        %381 = vmatpush.msra.mxu0 0.0
        %382 = vmatpush.msra.mxu0 0.0
        %383 = vmatpush.msra.mxu0 %v350
        %384 = vmatpush.msra.mxu0 %v338
        %385 = vmatpush.msra.mxu0 %v336
        %386 = vmatpush.msra.mxu0 %v334
        %387 = vmatpush.msra.mxu0 %v332
        %388 = vmatmul.f32.gmra.mxu0 %v343
        %v389 = vpop.f32.mrf.mxu0
        %v390 = vadd.f32 0.0, %v389
        %391 = vdwg.mxu0
        %392 = vst [vmem:[%s316] sm:$0xf] %v370
        %393 = vst [vmem:[%s316 + $0x8] sm:$0xf] %v390
        %v394 = vsel %vm345, %v370, 0.0
        %v395 = vsel %vm345, %v390, 0.0
        %v396 = vadd.f32 %v394, %v395
        %397 = vadd.xlane.f32.xlu0 %v396
        %v398 = vpop.xlane.xlu0 %397
        %vm399 = vcmask 3072
        %400 = vst.msk [vmem:[%s329] sm:$0xf] %vm399, %v398
        %v401 = vmul.f32 %v370, %v370
        %v402 = vmul.f32 %v390, %v390
        %v403 = vsel %vm345, %v401, 0.0
        %v404 = vsel %vm345, %v402, 0.0
        %v405 = vadd.f32 %v403, %v404
        %406 = vadd.xlane.f32.xlu0 %v405
        %v407 = vpop.xlane.xlu0 %406
        %vm408 = vcmask 11272
        %409 = vst.msk [vmem:[%s329] sm:$0xf] %vm408, %v407
        %v410 = vld [vmem:[#allocation8] sm:$0xf]
        %v411 = vld [vmem:[%s276] sm:$0xff]
        %v412 = vld [vmem:[%s276 + $0x8] sm:$0xff]
        %v413 = vld [vmem:[%s276 + $0x10] sm:$0xff]
        %v414 = vld [vmem:[%s276 + $0x18] sm:$0xff]
        %v415 = vld [vmem:[%s276 + $0x20] sm:$0xff]
        %v416 = vld [vmem:[%s276 + $0x28] sm:$0xff]
        %v417 = vld [vmem:[%s276 + $0x30] sm:$0xff]
        %v418 = vld [vmem:[%s276 + $0x38] sm:$0xff]
        %v419 = vld [vmem:[%s276 + $0x40] sm:$0xf]
        %v420 = vld [vmem:[%s276 + $0x48] sm:$0xf]
        %v422 = vsel %vm341, %v410, 0
        %v425 = vsel %vm345, %v419, 0
        %v428 = vsel %vm345, %v420, 0
        %430 = vmatpush.msra.mxu0 0.0
        %431 = vmatpush.msra.mxu0 0.0
        %432 = vmatpush.msra.mxu0 0.0
        %433 = vmatpush.msra.mxu0 0.0
        %434 = vmatpush.msra.mxu0 0.0
        %435 = vmatpush.msra.mxu0 0.0
        %436 = vmatpush.msra.mxu0 0.0
        %437 = vmatpush.msra.mxu0 0.0
        %438 = vmatpush.msra.mxu0 0.0
        %439 = vmatpush.msra.mxu0 0.0
        %440 = vmatpush.msra.mxu0 0.0
        %441 = vmatpush.msra.mxu0 %v425
        %442 = vmatpush.msra.mxu0 %v417
        %443 = vmatpush.msra.mxu0 %v415
        %444 = vmatpush.msra.mxu0 %v413
        %445 = vmatpush.msra.mxu0 %v411
        %446 = vmatmul.f32.gmra.mxu0 %v422
        %v447 = vpop.f32.mrf.mxu0
        %v448 = vadd.f32 0.0, %v447
        %449 = vdwg.mxu0
        %450 = vmatpush.msra.mxu0 0.0
        %451 = vmatpush.msra.mxu0 0.0
        %452 = vmatpush.msra.mxu0 0.0
        %453 = vmatpush.msra.mxu0 0.0
        %454 = vmatpush.msra.mxu0 0.0
        %455 = vmatpush.msra.mxu0 0.0
        %456 = vmatpush.msra.mxu0 0.0
        %457 = vmatpush.msra.mxu0 0.0
        %458 = vmatpush.msra.mxu0 0.0
        %459 = vmatpush.msra.mxu0 0.0
        %460 = vmatpush.msra.mxu0 0.0
        %461 = vmatpush.msra.mxu0 %v428
        %462 = vmatpush.msra.mxu0 %v418
        %463 = vmatpush.msra.mxu0 %v416
        %464 = vmatpush.msra.mxu0 %v414
        %465 = vmatpush.msra.mxu0 %v412
        %466 = vmatmul.f32.gmra.mxu0 %v422
        %v467 = vpop.f32.mrf.mxu0
        %v468 = vadd.f32 0.0, %v467
        %469 = vdwg.mxu0
        %v472 = vrot.slane %v448, 4
        %v473 = vrot.slane %v468, 4
        %476 = vst [vmem:[%s316] sm:$0xf0] %v472
        %477 = vst [vmem:[%s316 + $0x8] sm:$0xf0] %v473
        %v478 = vsel %vm345, %v448, 0.0
        %v479 = vsel %vm345, %v468, 0.0
        %v480 = vadd.f32 %v478, %v479
        %481 = vadd.xlane.f32.xlu0 %v480
        %v482 = vpop.xlane.xlu0 %481
        %483 = vst.msk [vmem:[%s329 + $0x4] sm:$0xf] %vm399, %v482
        %v484 = vmul.f32 %v448, %v448
        %v485 = vmul.f32 %v468, %v468
        %v486 = vsel %vm345, %v484, 0.0
        %v487 = vsel %vm345, %v485, 0.0
        %v488 = vadd.f32 %v486, %v487
        %489 = vadd.xlane.f32.xlu0 %v488
        %v490 = vpop.xlane.xlu0 %489
        %491 = vst.msk [vmem:[%s329 + $0x4] sm:$0xf] %vm408, %v490
        %s492 = sand.u32 %s129, 1
        %s493 = scalar_lea.sflag [#allocation4], %s492
        %s494 = sand.u32 %s129, 1
        %s495 = smul.addr %s494, 16
        %s496 = scalar_lea.vmem [#allocation10], %s495
        %p497 = scmp.lt.s32.totalorder %s27, 1
        %s498 = scalar_select %p497, %s27, 1
        %s499 = smul.addr %s498, 8
        %s500 = scalar_lea.vmem %s5, %s499
        // Predicated region
        $region53: #{tpu_custom_call.1} parent=35 // pred_check
          %p501 = pneg %p139
        $region54: #{tpu_custom_call.1} parent=35 // pred_check_branch
          %503 = sbr.rel (%p501) target = $region56
        $region55: #{tpu_custom_call.1} parent=35 // pred_region
          %s504 = smul.u32 2, %s27
          %506 = vsyncadd %s493, 0
          %s507 = smul.addr %s504, 8
          %s508 = scalar_lea.hbm %s4, %s507
          %s510 = sshll.u32 %s496, 4
          %s511 = int_to_ptr.vmem [resolvable:$true] %s510
          %s512 = sshll.u32 %s508, 4
          %s513 = int_to_ptr.hbm [resolvable:$true] %s512
          %515 = dma.vmem_to_hbm [thread:$0]  %s511, 256, %s513, %s493
        $region56: #{tpu_custom_call.1} parent=35 // pred_fallthru
          _
        // Predicated region
        $region57: #{tpu_custom_call.1} parent=35 // pred_check
          %p516 = pneg %p165
        $region58: #{tpu_custom_call.1} parent=35 // pred_check_branch
          %518 = sbr.rel (%p516) target = $region60
        $region59: #{tpu_custom_call.1} parent=35 // pred_region
          _
        $region60: #{tpu_custom_call.1} parent=35 // pred_fallthru
          _
      $region36: #{tpu_custom_call.1} parent=5 // pred_fallthru
        _
      %p519 = scmp.le.s32.totalorder 2, %s22
      // Predicated region
      $region61: #{tpu_custom_call.1} parent=5 // pred_check
        %p520 = pneg %p519
      $region62: #{tpu_custom_call.1} parent=5 // pred_check_branch
        %522 = sbr.rel (%p520) target = $region64
      $region63: #{tpu_custom_call.1} parent=5 // pred_region
        %s523 = ssub.s32 %s22, 2
        // Predicated region
        $region65: #{tpu_custom_call.1} parent=63 // pred_check
          %p524 = pneg %p145
        $region66: #{tpu_custom_call.1} parent=63 // pred_check_branch
          %526 = sbr.rel (%p524) target = $region68
        $region67: #{tpu_custom_call.1} parent=63 // pred_region
          %s527 = sand.u32 %s130, 1
          %s528 = scalar_lea.sflag [#allocation4], %s527
          %s529 = sand.u32 %s130, 1
          %s530 = smul.addr %s529, 16
          %s531 = scalar_lea.vmem [#allocation10], %s530
          %533 = dma.done %s528, 256
        $region68: #{tpu_custom_call.1} parent=63 // pred_fallthru
          _
        // Predicated region
        $region69: #{tpu_custom_call.1} parent=63 // pred_check
          %p534 = pneg %p171
        $region70: #{tpu_custom_call.1} parent=63 // pred_check_branch
          %536 = sbr.rel (%p534) target = $region72
        $region71: #{tpu_custom_call.1} parent=63 // pred_region
          %p537 = scmp.lt.s32.totalorder %s28, 1
          %s538 = scalar_select %p537, %s28, 1
          %s539 = smul.addr %s538, 8
          %s540 = scalar_lea.vmem %s5, %s539
        $region72: #{tpu_custom_call.1} parent=63 // pred_fallthru
          _
      $region64: #{tpu_custom_call.1} parent=5 // pred_fallthru
        _
    $region6: #{tpu_custom_call.1} parent=1 // loop_footer
      %s26 = sadd.s32 1, %s22
    $region7: #{tpu_custom_call.1} parent=1 // loop_footer_branch
      %21 = sbr.rel target = $region3
    $region8: #{tpu_custom_call.1} parent=1 // loop_exit
      _
    %541 = vsyncpa [#allocation3], 1
    %s542 = scalar_lea.sflag [#allocation3], 1
    %543 = vsyncpa %s542, 1
    %544 = vsyncpa [#allocation6], 1
    %s545 = scalar_lea.sflag [#allocation6], 1
    %546 = vsyncpa %s545, 1
    %547 = vsyncpa [#allocation9], 1
    %548 = vsyncpa [#allocation4], 1
    %s549 = scalar_lea.sflag [#allocation4], 1
    %550 = vsyncpa %s549, 1

</llo_original>
